<compile_context>
chip_gen: v6e
topology: v6e:2x2x1
jax: 0.10.0
libtpu: 0.0.40
codegen_flags: <defaults>
</compile_context>

<pallas_src>
import math

import jax
import jax.numpy as jnp
from jax.experimental import pallas as pl
from jax.experimental.pallas import tpu as pltpu


_ROW_BLOCK = 8          # sublane count of one vreg
_PAD_LOGIT = -1e9       # finite: exp(-|pad|)=0, sigmoid(pad)=0, bce(pad, 0)=0


def _round_up(x, m):
    return (x + m - 1) // m * m


def _bce_dice_sums_kernel(x_ref, t_ref, acc_ref):
    # acc_ref block: (1, 4, ROW_BLOCK) resident accumulator
    #   [0] sum of per-element BCE-with-logits
    #   [1] sum of sigmoid(x)
    #   [2] sum of target
    #   [3] sum of sigmoid(x) * target
    @pl.when(pl.program_id(1) == 0)
    def _():
        acc_ref[...] = jnp.zeros_like(acc_ref)

    x = x_ref[...].astype(jnp.float32)   # (ROW_BLOCK, tile_d)
    t = t_ref[...].astype(jnp.float32)   # (ROW_BLOCK, tile_d)

    # Share a single exp between the BCE log-term and the sigmoid.
    e = jnp.exp(-jnp.abs(x))
    log_term = jnp.log1p(e)
    # Numerically stable binary_cross_entropy_with_logits per element:
    #   max(x, 0) - x*t + log(1 + exp(-|x|))
    bce = jnp.maximum(x, 0.0) - x * t + log_term
    r = 1.0 / (1.0 + e)
    sig = jnp.where(x >= 0.0, r, e * r)   # stable sigmoid, reuses e
    inter = sig * t

    stats = jnp.concatenate(
        [bce.sum(axis=-1)[None, :],
         sig.sum(axis=-1)[None, :],
         t.sum(axis=-1)[None, :],
         inter.sum(axis=-1)[None, :]],
        axis=0)                            # (4, ROW_BLOCK)
    acc_ref[...] += stats[None]


def bce_dice_loss(input_logits, target, *, tile_d=8192):
    """Pallas implementation of BCEDiceLoss.forward(input, target)."""
    n = input_logits.shape[0]
    x = input_logits.reshape(n, -1)
    t = target.reshape(n, -1)
    d = x.shape[1]

    # Sublane-fold the feature dim: rows = lcm(n, 8) fills all 8 sublanes.
    r_fold = 8 // math.gcd(n, 8)
    rows = n * r_fold

    # Lane-dense D tiling (multiple of 128), padded so d_sub % tile_d == 0.
    d_sub_min = pl.cdiv(d, r_fold)
    td = max(128, min(int(tile_d), _round_up(d_sub_min, 128)))
    td = _round_up(td, 128)
    d_sub = _round_up(d_sub_min, td)
    d_pad = d_sub * r_fold

    if d_pad != d:
        # Padding contributes exactly 0 to all four accumulated sums.
        x = jnp.pad(x, ((0, 0), (0, d_pad - d)), constant_values=_PAD_LOGIT)
        t = jnp.pad(t, ((0, 0), (0, d_pad - d)), constant_values=0.0)

    x = x.reshape(rows, d_sub)
    t = t.reshape(rows, d_sub)

    n_row_blocks = rows // _ROW_BLOCK
    grid = (n_row_blocks, d_sub // td)

    in_spec = pl.BlockSpec((_ROW_BLOCK, td), lambda i, j: (i, j))
    out_spec = pl.BlockSpec((1, 4, _ROW_BLOCK), lambda i, j: (i, 0, 0))

    acc = pl.pallas_call(
        _bce_dice_sums_kernel,
        out_shape=jax.ShapeDtypeStruct((n_row_blocks, 4, _ROW_BLOCK),
                                       jnp.float32),
        grid_spec=pltpu.PrefetchScalarGridSpec(
            num_scalar_prefetch=0,
            grid=grid,
            in_specs=[in_spec, in_spec],
            out_specs=out_spec,
        ),
        compiler_params=pltpu.CompilerParams(
            dimension_semantics=("parallel", "arbitrary"),
            vmem_limit_bytes=32 * 1024 * 1024,
        ),
    )(x, t)

    # (row_blocks, 4, 8) -> (4, rows) -> per-sample sums (4, n).
    stats = jnp.transpose(acc, (1, 0, 2)).reshape(4, rows)
    per_sample = stats.reshape(4, n, r_fold).sum(axis=2)

    smooth = 1e-05
    bce = per_sample[0].sum() / (n * d)          # mean over ORIGINAL elements
    dice = (2.0 * per_sample[3] + smooth) / (per_sample[1] + per_sample[2] + smooth)
    dice = 1.0 - dice.sum() / n
    return 0.5 * bce + dice


def _reference(input_logits, target):
    """Pure-JAX reference matching the PyTorch module exactly."""
    x = input_logits.astype(jnp.float32)
    t = target.astype(jnp.float32)
    bce = jnp.mean(jnp.maximum(x, 0.0) - x * t + jnp.log1p(jnp.exp(-jnp.abs(x))))
    smooth = 1e-05
    n = x.shape[0]
    xf = jax.nn.sigmoid(x).reshape(n, -1)
    tf = t.reshape(n, -1)
    inter = (xf * tf).sum(1)
    dice = (2.0 * inter + smooth) / (xf.sum(1) + tf.sum(1) + smooth)
    dice = 1.0 - dice.sum() / n
    return 0.5 * bce + dice


if __name__ == "__main__":
    key = jax.random.PRNGKey(0)

    # Case 1: small segmentation-style shapes (N=2, C=4, H=W=16), exact tiling.
    k1, k2, k3, k4 = jax.random.split(key, 4)
    x1 = jax.random.normal(k1, (2, 4, 16, 16), dtype=jnp.float32)
    t1 = (jax.random.uniform(k2, (2, 4, 16, 16)) > 0.5).astype(jnp.float32)
    loss1 = jax.block_until_ready(bce_dice_loss(x1, t1))
    ref1 = jax.block_until_ready(_reference(x1, t1))
    assert jnp.allclose(loss1, ref1, rtol=1e-5, atol=1e-5), (loss1, ref1)

    # Case 2: awkward shapes (N=3, C=3, H=W=20) exercising padding and the
    # parallel row-block axis.
    x2 = jax.random.normal(k3, (3, 3, 20, 20), dtype=jnp.float32)
    t2 = (jax.random.uniform(k4, (3, 3, 20, 20)) > 0.5).astype(jnp.float32)
    loss2 = jax.block_until_ready(bce_dice_loss(x2, t2))
    ref2 = jax.block_until_ready(_reference(x2, t2))
    assert jnp.allclose(loss2, ref2, rtol=1e-5, atol=1e-5), (loss2, ref2)

    print("KERNEL_OK")
</pallas_src>

<mosaic_0001>
module attributes {stable_mosaic.version = 11 : i64} {
  func.func @_bce_dice_sums_kernel(%arg0: i32, %arg1: i32, %arg2: memref<8x256xf32, #tpu.memory_space<vmem>>, %arg3: memref<8x256xf32, #tpu.memory_space<vmem>>, %arg4: memref<1x4x8xf32, #tpu.memory_space<vmem>>) attributes {dimension_semantics = [#tpu.dimension_semantics<parallel>, #tpu.dimension_semantics<arbitrary>], iteration_bounds = array<i64: 1, 1>, scalar_prefetch = 0 : i64, scratch_operands = 0 : i64, tpu.core_type = #tpu.core_type<tc>, window_params = [{transform_indices = @transform_0, window_bounds = array<i64: 8, 256>}, {transform_indices = @transform_1, window_bounds = array<i64: 8, 256>}, {transform_indices = @transform_2, window_bounds = array<i64: 1, 4, 8>}]} {
    %c0_i32 = arith.constant 0 : i32
    %0 = arith.cmpi eq, %arg1, %c0_i32 : i32
    %1 = arith.extui %0 : i1 to i32
    %c0_i32_0 = arith.constant 0 : i32
    %2 = arith.cmpi ne, %1, %c0_i32_0 : i32
    scf.if %2 {
      %cst_18 = arith.constant 0.000000e+00 : f32
      %37 = vector.broadcast %cst_18 : f32 to vector<1x4x8xf32>
      %c0_19 = arith.constant 0 : index
      %c0_20 = arith.constant 0 : index
      %c0_21 = arith.constant 0 : index
      %38 = vector.load %arg4[%c0_19, %c0_20, %c0_21] : memref<1x4x8xf32, #tpu.memory_space<vmem>>, vector<1x4x8xf32>
      tpu.vector_store %arg4[%c0_19, %c0_20, %c0_21], %37 {strides = array<i32>} : memref<1x4x8xf32, #tpu.memory_space<vmem>>, vector<1x4x8xf32>,
    } else {
    }
    %c0 = arith.constant 0 : index
    %c0_1 = arith.constant 0 : index
    %3 = vector.load %arg2[%c0, %c0_1] : memref<8x256xf32, #tpu.memory_space<vmem>>, vector<8x256xf32>
    %c0_2 = arith.constant 0 : index
    %c0_3 = arith.constant 0 : index
    %4 = vector.load %arg3[%c0_2, %c0_3] : memref<8x256xf32, #tpu.memory_space<vmem>>, vector<8x256xf32>
    %5 = math.absf %3 : vector<8x256xf32>
    %cst = arith.constant 0.000000e+00 : f32
    %6 = vector.broadcast %cst : f32 to vector<8x256xf32>
    %7 = arith.subf %6, %5 : vector<8x256xf32>
    %8 = math.exp %7 : vector<8x256xf32>
    %9 = math.log1p %8 : vector<8x256xf32>
    %cst_4 = arith.constant 0.000000e+00 : f32
    %10 = vector.broadcast %cst_4 : f32 to vector<8x256xf32>
    %11 = arith.maximumf %3, %10 : vector<8x256xf32>
    %12 = arith.mulf %3, %4 : vector<8x256xf32>
    %13 = arith.subf %11, %12 : vector<8x256xf32>
    %14 = arith.addf %13, %9 : vector<8x256xf32>
    %cst_5 = arith.constant 1.000000e+00 : f32
    %15 = vector.broadcast %cst_5 : f32 to vector<8x256xf32>
    %16 = arith.addf %15, %8 : vector<8x256xf32>
    %cst_6 = arith.constant 1.000000e+00 : f32
    %17 = vector.broadcast %cst_6 : f32 to vector<8x256xf32>
    %18 = arith.divf %17, %16 : vector<8x256xf32>
    %cst_7 = arith.constant 0.000000e+00 : f32
    %19 = vector.broadcast %cst_7 : f32 to vector<8x256xf32>
    %20 = arith.cmpf oge, %3, %19 : vector<8x256xf32>
    %21 = arith.mulf %8, %18 : vector<8x256xf32>
    %22 = arith.select %20, %18, %21 : vector<8x256xi1>, vector<8x256xf32>
    %23 = arith.mulf %22, %4 : vector<8x256xf32>
    %cst_8 = arith.constant dense<0.000000e+00> : vector<8xf32>
    %24 = vector.multi_reduction <add>, %14, %cst_8 [1] : vector<8x256xf32> to vector<8xf32>
    %25 = vector.shape_cast %24 : vector<8xf32> to vector<1x8xf32>
    %cst_9 = arith.constant dense<0.000000e+00> : vector<8xf32>
    %26 = vector.multi_reduction <add>, %22, %cst_9 [1] : vector<8x256xf32> to vector<8xf32>
    %27 = vector.shape_cast %26 : vector<8xf32> to vector<1x8xf32>
    %cst_10 = arith.constant dense<0.000000e+00> : vector<8xf32>
    %28 = vector.multi_reduction <add>, %4, %cst_10 [1] : vector<8x256xf32> to vector<8xf32>
    %29 = vector.shape_cast %28 : vector<8xf32> to vector<1x8xf32>
    %cst_11 = arith.constant dense<0.000000e+00> : vector<8xf32>
    %30 = vector.multi_reduction <add>, %23, %cst_11 [1] : vector<8x256xf32> to vector<8xf32>
    %31 = vector.shape_cast %30 : vector<8xf32> to vector<1x8xf32>
    %32 = tpu.concatenate %25, %27, %29, %31 in 0 : vector<1x8xf32>, vector<1x8xf32>, vector<1x8xf32>, vector<1x8xf32> -> vector<4x8xf32>
    %c0_12 = arith.constant 0 : index
    %c0_13 = arith.constant 0 : index
    %c0_14 = arith.constant 0 : index
    %33 = vector.load %arg4[%c0_12, %c0_13, %c0_14] : memref<1x4x8xf32, #tpu.memory_space<vmem>>, vector<1x4x8xf32>
    %34 = vector.shape_cast %32 : vector<4x8xf32> to vector<1x4x8xf32>
    %35 = arith.addf %33, %34 : vector<1x4x8xf32>
    %c0_15 = arith.constant 0 : index
    %c0_16 = arith.constant 0 : index
    %c0_17 = arith.constant 0 : index
    %36 = vector.load %arg4[%c0_15, %c0_16, %c0_17] : memref<1x4x8xf32, #tpu.memory_space<vmem>>, vector<1x4x8xf32>
    tpu.vector_store %arg4[%c0_15, %c0_16, %c0_17], %35 {strides = array<i32>} : memref<1x4x8xf32, #tpu.memory_space<vmem>>, vector<1x4x8xf32>,
    return
  }
  func.func @transform_0(%arg0: i32, %arg1: i32) -> (i32, i32) {
    %c0_i32 = arith.constant 0 : i32
    return %arg0, %arg1 : i32, i32
  }
  func.func @transform_1(%arg0: i32, %arg1: i32) -> (i32, i32) {
    %c0_i32 = arith.constant 0 : i32
    return %arg0, %arg1 : i32, i32
  }
  func.func @transform_2(%arg0: i32, %arg1: i32) -> (i32, i32, i32) {
    %c0_i32 = arith.constant 0 : i32
    %c0_i32_0 = arith.constant 0 : i32
    %c0_i32_1 = arith.constant 0 : i32
    return %arg0, %c0_i32, %c0_i32_0 : i32, i32, i32
  }
}

</mosaic_0001>

<llo_original>
// kernel: tpu_custom_call.1
$region0: #{tpu_custom_call.1}
  #allocation0 [shape = 'u32[]', space=smem, size = 0x4, offset = 0x4, fixed_abs, tag = 'smem constant byte address 0x4 - core index']
  #allocation1 [shape = 'u32[144,128]{1,0:T(1,128)}', space=vmem, size = 0x12000, scoped, tag = 'internal scratch']
  %s0 = inlined_call_operand.hbm [shape: f32[8,256], index: 0, kind: input, shape index: {}]
  %s1 = inlined_call_operand.hbm [shape: f32[8,256], index: 1, kind: input, shape index: {}]
  %s2 = inlined_call_operand.hbm [shape: f32[1,4,8], index: 2, kind: output, shape index: {}]
  %s3 = sld [smem:[#allocation0]]
  $region30: #{tpu_custom_call.1} parent=0
    _
  %s5 = ssub.s32 1, %s3
  %s6 = scalar_select 0, %s5, %s3
  $region1: #{tpu_custom_call.1} parent=0
    #allocation2 [shape = 'u8[8192]{0}', space=vmem, size = 0x2000, scoped, tag = 'input window, operand 0, single buffered']
    #allocation3 [shape = 's32[1]{0}', space=sflag, size = 0x4, scoped, tag = 'scoped memory for tpu_custom_call.1']
    #allocation4 [shape = 's32[1]{0}', space=sflag, size = 0x4, scoped, tag = 'scoped memory for tpu_custom_call.1']
    #allocation5 [shape = 'u8[8192]{0}', space=vmem, size = 0x2000, scoped, tag = 'input window, operand 1, single buffered']
    #allocation6 [shape = 's32[1]{0}', space=sflag, size = 0x4, scoped, tag = 'scoped memory for tpu_custom_call.1']
    #allocation7 [shape = 'u8[2048]{0}', space=vmem, size = 0x800, scoped, tag = 'output window, operand 0, single buffered']
    %7 = vsyncpa [#allocation3], 0
    %8 = vsyncpa [#allocation6], 0
    %9 = vsyncpa [#allocation4], 0
    // Predicated region
    $region2: #{tpu_custom_call.1} parent=1 // pred_check
      _
    $region3: #{tpu_custom_call.1} parent=1 // pred_check_branch
      %11 = sbr.rel (0) target = $region5
    $region4: #{tpu_custom_call.1} parent=1 // pred_region
      %s13 = ssub.s32 256, 256
      %14 = vsyncadd [#allocation3], %s13
      %s16 = sshll.u32 [#allocation2], 4
      %s17 = int_to_ptr.vmem [resolvable:$true] %s16
      %19 = dma.hbm_to_vmem [thread:$0]  %s0, 256, %s17, [#allocation3]
    $region5: #{tpu_custom_call.1} parent=1 // pred_fallthru
      _
    // Predicated region
    $region6: #{tpu_custom_call.1} parent=1 // pred_check
      _
    $region7: #{tpu_custom_call.1} parent=1 // pred_check_branch
      %21 = sbr.rel (0) target = $region9
    $region8: #{tpu_custom_call.1} parent=1 // pred_region
      %s23 = ssub.s32 256, 256
      %24 = vsyncadd [#allocation6], %s23
      %s26 = sshll.u32 [#allocation5], 4
      %s27 = int_to_ptr.vmem [resolvable:$true] %s26
      %29 = dma.hbm_to_vmem [thread:$0]  %s1, 256, %s27, [#allocation6]
    $region9: #{tpu_custom_call.1} parent=1 // pred_fallthru
      _
    // Predicated region
    $region10: #{tpu_custom_call.1} parent=1 // pred_check
      _
    $region11: #{tpu_custom_call.1} parent=1 // pred_check_branch
      %31 = sbr.rel (0) target = $region13
    $region12: #{tpu_custom_call.1} parent=1 // pred_region
      %32 = dma.done [#allocation3], 256
    $region13: #{tpu_custom_call.1} parent=1 // pred_fallthru
      _
    // Predicated region
    $region14: #{tpu_custom_call.1} parent=1 // pred_check
      _
    $region15: #{tpu_custom_call.1} parent=1 // pred_check_branch
      %34 = sbr.rel (0) target = $region17
    $region16: #{tpu_custom_call.1} parent=1 // pred_region
      %35 = dma.done [#allocation6], 256
    $region17: #{tpu_custom_call.1} parent=1 // pred_fallthru
      _
    %p36 = scmp.eq.s32.totalorder 0, 0
    // Predicated region
    $region18: #{tpu_custom_call.1} parent=1 // pred_check
      %p37 = pneg %p36
    $region19: #{tpu_custom_call.1} parent=1 // pred_check_branch
      %39 = sbr.rel (%p37) target = $region21
    $region20: #{tpu_custom_call.1} parent=1 // pred_region
      %vm40 = vcmask 60416
      %41 = vst.msk [vmem:[#allocation7] sm:$0xf] %vm40, 0.0
    $region21: #{tpu_custom_call.1} parent=1 // pred_fallthru
      _
    %v42 = vld [vmem:[#allocation2] sm:$0xff]
    %v43 = vld [vmem:[#allocation2 + $0x8] sm:$0xff]
    %v44 = vld [vmem:[#allocation5] sm:$0xff]
    %v45 = vld [vmem:[#allocation5 + $0x8] sm:$0xff]
    %v46 = vand.u32 2147483647, %v42
    %v47 = vand.u32 2147483647, %v43
    %v48 = vsub.f32 0.0, %v46
    %v49 = vsub.f32 0.0, %v47
    %v50 = vmul.f32 %v48, 1.442695
    %v51 = vpow.pop %v50
    %v52 = vmul.f32 %v49, 1.442695
    %v53 = vpow.pop %v52
    %v54 = vadd.f32 %v51, 1.0
    %v55 = vlog2.pop %v54
    %v56 = vmul.f32 %v55, 0.6931472
    %v57 = vmul.f32 -0.5, %v51
    %v58 = vadd.f32 %v57, 1.0
    %v59 = vmul.f32 %v58, %v51
    %v60 = vand.u32 2147483647, %v51
    %vm61 = vcmp.lt.f32.partialorder %v60, 0.0004427343
    %v62 = vsel %vm61, %v59, %v56
    %v63 = vadd.f32 %v53, 1.0
    %v64 = vlog2.pop %v63
    %v65 = vmul.f32 %v64, 0.6931472
    %v66 = vmul.f32 -0.5, %v53
    %v67 = vadd.f32 %v66, 1.0
    %v68 = vmul.f32 %v67, %v53
    %v69 = vand.u32 2147483647, %v53
    %vm70 = vcmp.lt.f32.partialorder %v69, 0.0004427343
    %v71 = vsel %vm70, %v68, %v65
    %v72 = vmax.f32 %v42, 0.0
    %v73 = vmax.f32 %v43, 0.0
    %v74 = vmul.f32 %v42, %v44
    %v75 = vmul.f32 %v43, %v45
    %v76 = vsub.f32 %v72, %v74
    %v77 = vsub.f32 %v73, %v75
    %v78 = vadd.f32 %v76, %v62
    %v79 = vadd.f32 %v77, %v71
    %v80 = vadd.f32 %v51, 1.0
    %v81 = vadd.f32 %v53, 1.0
    %v82 = vrcp.pop %v80
    %v83 = vmul.f32 1.0, %v82
    %v84 = vrcp.pop %v81
    %v85 = vmul.f32 1.0, %v84
    %vm86 = vcmp.ge.f32.partialorder %v42, 0.0
    %vm87 = vcmp.ge.f32.partialorder %v43, 0.0
    %v88 = vmul.f32 %v51, %v83
    %v89 = vmul.f32 %v53, %v85
    %v90 = vsel %vm86, %v83, %v88
    %v91 = vsel %vm87, %v85, %v89
    %v92 = vmul.f32 %v90, %v44
    %v93 = vmul.f32 %v91, %v45
    %v94 = vadd.f32 %v78, %v79
    %95 = vadd.xlane.f32.xlu0 %v94
    %v96 = vpop.xlane.xlu0 %95
    %v97 = vadd.f32 %v90, %v91
    %98 = vadd.xlane.f32.xlu0 %v97
    %v99 = vpop.xlane.xlu0 %98
    %v100 = vadd.f32 %v44, %v45
    %101 = vadd.xlane.f32.xlu0 %v100
    %v102 = vpop.xlane.xlu0 %101
    %v103 = vadd.f32 %v92, %v93
    %104 = vadd.xlane.f32.xlu0 %v103
    %v105 = vpop.xlane.xlu0 %104
    %v107 = vlaneseq
    %v108 = vand.u32 %v107, 127
    %v109 = vlaneseq
    %v110 = vshrl.u32 %v109, 7
    %v111 = vsub.s32 %v108, %v110
    %v112 = vrot.slane %v96, %v111
    %v115 = vlaneseq
    %v116 = vshrl.u32 %v115, 7
    %v117 = vsub.s32 %v108, %v116
    %v118 = vrot.slane %v99, %v117
    %v121 = vlaneseq
    %v122 = vshrl.u32 %v121, 7
    %v123 = vsub.s32 %v108, %v122
    %v124 = vrot.slane %v102, %v123
    %v127 = vlaneseq
    %v128 = vshrl.u32 %v127, 7
    %v129 = vsub.s32 %v108, %v128
    %v130 = vrot.slane %v105, %v129
    %vm132 = vcmask 1040384
    %v133 = vsel %vm132, %v112, %v118
    %vm134 = vcmask 1041408
    %v135 = vsel %vm134, %v133, %v124
    %vm136 = vcmask 1042432
    %v137 = vsel %vm136, %v135, %v130
    %v138 = vld [vmem:[#allocation7] sm:$0xf]
    %v139 = vadd.f32 %v138, %v137
    %vm140 = vcmask 60416
    %141 = vst.msk [vmem:[#allocation7] sm:$0xf] %vm140, %v139
    // Predicated region
    $region22: #{tpu_custom_call.1} parent=1 // pred_check
      _
    $region23: #{tpu_custom_call.1} parent=1 // pred_check_branch
      %143 = sbr.rel (0) target = $region25
    $region24: #{tpu_custom_call.1} parent=1 // pred_region
      %s145 = ssub.s32 64, 64
      %146 = vsyncadd [#allocation4], %s145
      %s148 = sshll.u32 [#allocation7], 4
      %s149 = int_to_ptr.vmem [resolvable:$true] %s148
      %151 = dma.vmem_to_hbm [thread:$0]  %s149, 64, %s2, [#allocation4]
    $region25: #{tpu_custom_call.1} parent=1 // pred_fallthru
      _
    // Predicated region
    $region26: #{tpu_custom_call.1} parent=1 // pred_check
      _
    $region27: #{tpu_custom_call.1} parent=1 // pred_check_branch
      %153 = sbr.rel (0) target = $region29
    $region28: #{tpu_custom_call.1} parent=1 // pred_region
      %154 = dma.done [#allocation4], 64
    $region29: #{tpu_custom_call.1} parent=1 // pred_fallthru
      _
    %155 = vsyncpa [#allocation3], 1
    %156 = vsyncpa [#allocation6], 1
    %157 = vsyncpa [#allocation4], 1

</llo_original>
